<compile_context>
chip_gen: v6e
topology: v6e:2x2x1
jax: 0.10.0
libtpu: 0.0.40
codegen_flags: <defaults>
</compile_context>

<pallas_src>
import functools
import math

import jax
import jax.numpy as jnp
from jax import lax
from jax.experimental import pallas as pl
from jax.experimental.pallas import tpu as pltpu


def _round_up(x, m):
    return ((x + m - 1) // m) * m


def _tpu_vmem_bytes():
    """Per-core VMEM capacity; conservative (v7x) fallback if query unavailable."""
    try:
        info = pltpu.get_tpu_info()
        v = getattr(info, "vmem_capacity_bytes", None)
        if v:
            return int(v)
    except Exception:
        pass
    return 64 * 1024 * 1024


# ----------------------------------------------------------------------------
# Kernel 1: batched input projection ("gates_x") for both directions, layer 0.
# ----------------------------------------------------------------------------
def _gx_from_x_kernel(x_ref, wf_ref, wb_ref, bf_ref, bb_ref, gxf_ref, gxb_ref):
    """gx_fwd = x @ Wf + bf ; gx_bwd = x @ Wb + bb.   x tile: (R, D_in) f32."""
    x = x_ref[...].astype(jnp.bfloat16)
    gf = jnp.dot(x, wf_ref[...], preferred_element_type=jnp.float32) + bf_ref[...]
    gb = jnp.dot(x, wb_ref[...], preferred_element_type=jnp.float32) + bb_ref[...]
    gxf_ref[...] = gf.astype(gxf_ref.dtype)
    gxb_ref[...] = gb.astype(gxb_ref.dtype)


def _run_gx_from_x(x2d, wf, wb, bf, bb, *, row_tile, vmem_limit):
    N, D = x2d.shape
    G = wf.shape[-1]
    grid = (N // row_tile,)
    return pl.pallas_call(
        _gx_from_x_kernel,
        out_shape=(jax.ShapeDtypeStruct((N, G), jnp.bfloat16),
                   jax.ShapeDtypeStruct((N, G), jnp.bfloat16)),
        grid=grid,
        in_specs=[
            pl.BlockSpec((row_tile, D), lambda i: (i, 0)),
            pl.BlockSpec((D, G), lambda i: (0, 0)),
            pl.BlockSpec((D, G), lambda i: (0, 0)),
            pl.BlockSpec((1, G), lambda i: (0, 0)),
            pl.BlockSpec((1, G), lambda i: (0, 0)),
        ],
        out_specs=(pl.BlockSpec((row_tile, G), lambda i: (i, 0)),
                   pl.BlockSpec((row_tile, G), lambda i: (i, 0))),
        compiler_params=pltpu.CompilerParams(
            dimension_semantics=("parallel",),
            vmem_limit_bytes=vmem_limit),
    )(x2d, wf, wb, bf, bb)


# ----------------------------------------------------------------------------
# Kernel 2: input projection for layers > 0 (inputs are the previous layer's
# fwd/bwd halves kept separate — never materialize the concat).
# ----------------------------------------------------------------------------
def _gx_from_pair_kernel(xf_ref, xb_ref, wff_ref, wfb_ref, wbf_ref, wbb_ref,
                         bf_ref, bb_ref, gxf_ref, gxb_ref):
    xf = xf_ref[...]          # bf16 already
    xb = xb_ref[...]
    gf = (jnp.dot(xf, wff_ref[...], preferred_element_type=jnp.float32)
          + jnp.dot(xb, wfb_ref[...], preferred_element_type=jnp.float32)
          + bf_ref[...])
    gb = (jnp.dot(xf, wbf_ref[...], preferred_element_type=jnp.float32)
          + jnp.dot(xb, wbb_ref[...], preferred_element_type=jnp.float32)
          + bb_ref[...])
    gxf_ref[...] = gf.astype(gxf_ref.dtype)
    gxb_ref[...] = gb.astype(gxb_ref.dtype)


def _run_gx_from_pair(xf2d, xb2d, wff, wfb, wbf, wbb, bf, bb, *, row_tile,
                      vmem_limit):
    N, H = xf2d.shape
    G = wff.shape[-1]
    grid = (N // row_tile,)
    return pl.pallas_call(
        _gx_from_pair_kernel,
        out_shape=(jax.ShapeDtypeStruct((N, G), jnp.bfloat16),
                   jax.ShapeDtypeStruct((N, G), jnp.bfloat16)),
        grid=grid,
        in_specs=[
            pl.BlockSpec((row_tile, H), lambda i: (i, 0)),
            pl.BlockSpec((row_tile, H), lambda i: (i, 0)),
            pl.BlockSpec((H, G), lambda i: (0, 0)),
            pl.BlockSpec((H, G), lambda i: (0, 0)),
            pl.BlockSpec((H, G), lambda i: (0, 0)),
            pl.BlockSpec((H, G), lambda i: (0, 0)),
            pl.BlockSpec((1, G), lambda i: (0, 0)),
            pl.BlockSpec((1, G), lambda i: (0, 0)),
        ],
        out_specs=(pl.BlockSpec((row_tile, G), lambda i: (i, 0)),
                   pl.BlockSpec((row_tile, G), lambda i: (i, 0))),
        compiler_params=pltpu.CompilerParams(
            dimension_semantics=("parallel",),
            vmem_limit_bytes=vmem_limit),
    )(xf2d, xb2d, wff, wfb, wbf, wbb, bf, bb)


# ----------------------------------------------------------------------------
# Kernel 3: fused bidirectional LSTM recurrence, chunked over T (+ optional
# batch-group parallel axis for v7x megacore).
# ----------------------------------------------------------------------------
def _bilstm_kernel(gxf_ref, gxb_ref, wcat_ref, h0_ref, c0_ref,
                   outf_ref, outb_ref, hfin_ref, cfin_ref,
                   hf_s, cf_s, hb_s, cb_s,
                   *, t_chunk, hidden, t_real, t_pad, b_blk):
    """One (batch-group, T-chunk) tile of the fwd+bwd recurrence.

    gxf_ref : (TC, Bb, 4H) bf16  x-gates, fwd direction, chunk i (forward order)
    gxb_ref : (TC, Bb, 4H) bf16  x-gates, bwd direction, chunk nc-1-i
    wcat    : (H, 8H) bf16       [W_hh_fwd | W_hh_bwd]
    h0/c0   : (2, Bb, H) f32     initial states [fwd, bwd]
    outf/outb : (TC, Bb, H) bf16 per-direction hidden outputs (global time order)
    hfin/cfin : (2, Bb, H) f32   final states [fwd, bwd]
    *_s     : (Bb, H) f32 VMEM scratch carrying h/c across grid steps.
    Gate column layout is [i, f, o, g] (reordered at weight-prep time).
    """
    i = pl.program_id(1)
    nc = pl.num_programs(1)
    H = hidden
    B = b_blk

    @pl.when(i == 0)
    def _init():
        hf_s[...] = h0_ref[0]
        cf_s[...] = c0_ref[0]
        hb_s[...] = h0_ref[1]
        cb_s[...] = c0_ref[1]

    # Hoisted out of the time loop: recurrent weights stay resident for the chunk.
    w_cat = wcat_ref[...]                       # (H, 8H) bf16
    needs_mask = (t_pad != t_real)              # static

    def step(t, carry):
        h_f, c_f, h_b, c_b = carry
        tr = t_chunk - 1 - t                    # in-kernel time reversal (bwd)
        # One fused MXU push for both directions (block-diagonal extraction).
        h_cat = jnp.concatenate([h_f, h_b], axis=0).astype(jnp.bfloat16)   # (2B, H)
        g_all = jnp.dot(h_cat, w_cat, preferred_element_type=jnp.float32)  # (2B, 8H)
        g_f = gxf_ref[t].astype(jnp.float32) + g_all[:B, :4 * H]
        g_b = gxb_ref[tr].astype(jnp.float32) + g_all[B:, 4 * H:]
        # One wide sigmoid + one tanh per direction ([i|f|o] then [g]).
        s_f = jax.nn.sigmoid(g_f[:, :3 * H])
        s_b = jax.nn.sigmoid(g_b[:, :3 * H])
        t_f = jnp.tanh(g_f[:, 3 * H:])
        t_b = jnp.tanh(g_b[:, 3 * H:])
        c_fn = s_f[:, H:2 * H] * c_f + s_f[:, :H] * t_f
        c_bn = s_b[:, H:2 * H] * c_b + s_b[:, :H] * t_b
        h_fn = s_f[:, 2 * H:3 * H] * jnp.tanh(c_fn)
        h_bn = s_b[:, 2 * H:3 * H] * jnp.tanh(c_bn)
        outf_ref[t] = h_fn.astype(outf_ref.dtype)
        outb_ref[tr] = h_bn.astype(outb_ref.dtype)
        if needs_mask:
            # Padded timesteps (>= t_real) must not touch the carries; their
            # output rows land in the padded region and are sliced away.
            valid_f = (i * t_chunk + t) < t_real
            valid_b = ((nc - 1 - i) * t_chunk + tr) < t_real
            h_fn = jnp.where(valid_f, h_fn, h_f)
            c_fn = jnp.where(valid_f, c_fn, c_f)
            h_bn = jnp.where(valid_b, h_bn, h_b)
            c_bn = jnp.where(valid_b, c_bn, c_b)
        return (h_fn, c_fn, h_bn, c_bn)

    carry0 = (hf_s[...], cf_s[...], hb_s[...], cb_s[...])
    h_f, c_f, h_b, c_b = lax.fori_loop(0, t_chunk, step, carry0, unroll=4)

    hf_s[...] = h_f
    cf_s[...] = c_f
    hb_s[...] = h_b
    cb_s[...] = c_b

    @pl.when(i == nc - 1)
    def _finalize():
        hfin_ref[0] = h_f
        hfin_ref[1] = h_b
        cfin_ref[0] = c_f
        cfin_ref[1] = c_b


def _run_bilstm(gx_f, gx_b, wh_cat, h0, c0, *, t_chunk, t_real, ng, vmem_limit):
    T_pad, B, G = gx_f.shape
    H = h0.shape[-1]
    nc = T_pad // t_chunk
    b_blk = B // ng
    kernel = functools.partial(_bilstm_kernel, t_chunk=t_chunk, hidden=H,
                               t_real=t_real, t_pad=T_pad, b_blk=b_blk)
    out_shapes = (
        jax.ShapeDtypeStruct((T_pad, B, H), jnp.bfloat16),   # out_f
        jax.ShapeDtypeStruct((T_pad, B, H), jnp.bfloat16),   # out_b
        jax.ShapeDtypeStruct((2, B, H), jnp.float32),        # h_final [fwd, bwd]
        jax.ShapeDtypeStruct((2, B, H), jnp.float32),        # c_final [fwd, bwd]
    )
    in_specs = [
        pl.BlockSpec((t_chunk, b_blk, G), lambda g, i: (i, g, 0)),            # gx_f
        pl.BlockSpec((t_chunk, b_blk, G), lambda g, i: (nc - 1 - i, g, 0)),   # gx_b rev
        pl.BlockSpec((H, 2 * G), lambda g, i: (0, 0)),                        # wh_cat
        pl.BlockSpec((2, b_blk, H), lambda g, i: (0, g, 0)),                  # h0
        pl.BlockSpec((2, b_blk, H), lambda g, i: (0, g, 0)),                  # c0
    ]
    out_specs = (
        pl.BlockSpec((t_chunk, b_blk, H), lambda g, i: (i, g, 0)),            # out_f
        pl.BlockSpec((t_chunk, b_blk, H), lambda g, i: (nc - 1 - i, g, 0)),   # out_b rev
        pl.BlockSpec((2, b_blk, H), lambda g, i: (0, g, 0)),                  # h_fin
        pl.BlockSpec((2, b_blk, H), lambda g, i: (0, g, 0)),                  # c_fin
    )
    return pl.pallas_call(
        kernel,
        out_shape=out_shapes,
        grid=(ng, nc),
        in_specs=in_specs,
        out_specs=out_specs,
        scratch_shapes=[pltpu.VMEM((b_blk, H), jnp.float32)] * 4,
        compiler_params=pltpu.CompilerParams(
            dimension_semantics=("parallel", "arbitrary"),
            vmem_limit_bytes=vmem_limit),
    )(gx_f, gx_b, wh_cat, h0, c0)


# ----------------------------------------------------------------------------
# Kernel 4: fused concat(fwd, bwd) + final Linear (row-tiled, lane-padded O).
# ----------------------------------------------------------------------------
def _concat_linear_kernel(f_ref, b_ref, lwf_ref, lwb_ref, lb_ref,
                          hid_ref, y_ref):
    """hid = [f | b] (f32) ; y = f @ Wf + b @ Wb + bias.   f,b tiles: (R, H) bf16."""
    f = f_ref[...]
    b = b_ref[...]
    H = f.shape[-1]
    hid_ref[:, :H] = f.astype(hid_ref.dtype)
    hid_ref[:, H:] = b.astype(hid_ref.dtype)
    y_ref[...] = (jnp.dot(f, lwf_ref[...], preferred_element_type=jnp.float32)
                  + jnp.dot(b, lwb_ref[...], preferred_element_type=jnp.float32)
                  + lb_ref[...])


def _run_concat_linear(f2d, b2d, lin_wf, lin_wb, lin_b, *, row_tile, vmem_limit):
    N, H = f2d.shape
    Op = lin_wf.shape[-1]
    grid = (N // row_tile,)
    return pl.pallas_call(
        _concat_linear_kernel,
        out_shape=(jax.ShapeDtypeStruct((N, 2 * H), jnp.float32),
                   jax.ShapeDtypeStruct((N, Op), jnp.float32)),
        grid=grid,
        in_specs=[
            pl.BlockSpec((row_tile, H), lambda i: (i, 0)),
            pl.BlockSpec((row_tile, H), lambda i: (i, 0)),
            pl.BlockSpec((H, Op), lambda i: (0, 0)),
            pl.BlockSpec((H, Op), lambda i: (0, 0)),
            pl.BlockSpec((1, Op), lambda i: (0, 0)),
        ],
        out_specs=(pl.BlockSpec((row_tile, 2 * H), lambda i: (i, 0)),
                   pl.BlockSpec((row_tile, Op), lambda i: (i, 0))),
        compiler_params=pltpu.CompilerParams(
            dimension_semantics=("parallel",),
            vmem_limit_bytes=vmem_limit),
    )(f2d, b2d, lin_wf, lin_wb, lin_b)


# ----------------------------------------------------------------------------
# Decoder module (parameters + forward glue)
# ----------------------------------------------------------------------------
class Decoder:
    def __init__(self, input_dim, output_dim, hidden_dim, num_layers, dropout,
                 bidirectional=True, batch_first=False, *, key):
        assert not batch_first, "this implementation uses time-major (T, B, F)"
        # The reference linner = Linear(hidden_dim*2, ...) applied to the LSTM
        # output only type-checks with a bidirectional LSTM.
        assert bidirectional, "reference forward requires bidirectional=True"
        self.input_dim = input_dim
        self.output_dim = output_dim
        self.hidden_dim = hidden_dim
        self.num_layers = num_layers
        self.dropout = dropout  # inference: no-op
        # TODO(synk): training-mode inter-layer dropout mask is not implemented.

        H = hidden_dim
        k = 1.0 / math.sqrt(H)
        keys = iter(jax.random.split(key, num_layers * 2 * 4 + 2))

        def u(shape, scale=k):
            return jax.random.uniform(next(keys), shape, jnp.float32, -scale, scale)

        def reorder(w):
            # last-dim gate blocks: PyTorch [i, f, g, o] -> kernel [i, f, o, g]
            ii = w[..., 0:H]
            ff = w[..., H:2 * H]
            gg = w[..., 2 * H:3 * H]
            oo = w[..., 3 * H:4 * H]
            return jnp.concatenate([ii, ff, oo, gg], axis=-1)

        self.layers = []
        for layer in range(num_layers):
            d_in = input_dim if layer == 0 else 2 * H
            per_dir = []
            for _ in range(2):  # fwd, bwd (PyTorch: weight_*_l{k}, weight_*_l{k}_reverse)
                w_ih = u((4 * H, d_in))
                w_hh = u((4 * H, H))
                b_ih = u((4 * H,))
                b_hh = u((4 * H,))
                w_x = reorder(jnp.transpose(w_ih)).astype(jnp.bfloat16)   # (d_in, 4H)
                w_h = reorder(jnp.transpose(w_hh)).astype(jnp.bfloat16)   # (H, 4H)
                bias = reorder((b_ih + b_hh).reshape(1, 4 * H))           # (1, 4H) f32
                per_dir.append((w_x, w_h, bias))
            (wx_f, wh_f, b_f), (wx_b, wh_b, b_b) = per_dir
            entry = dict(
                # single fused recurrent weight [W_hh_fwd | W_hh_bwd] : (H, 8H)
                wh_cat=jnp.concatenate([wh_f, wh_b], axis=-1),
                b_f=b_f, b_b=b_b)
            if layer == 0:
                entry.update(wx_f=wx_f, wx_b=wx_b)
            else:
                # split input weight by the [prev_fwd | prev_bwd] halves to avoid
                # materializing the concat between layers.
                entry.update(wx_f_top=wx_f[:H], wx_f_bot=wx_f[H:],
                             wx_b_top=wx_b[:H], wx_b_bot=wx_b[H:])
            self.layers.append(entry)

        # linner = Linear(hidden_dim * 2, output_dim), split by [fwd | bwd] halves
        # and lane-padded to a multiple of 128 output columns.
        kl = 1.0 / math.sqrt(2 * H)
        O = output_dim
        O_pad = _round_up(O, 128)
        lin_w_t = jnp.transpose(u((O, 2 * H), kl))                        # (2H, O)
        lin_w_t = jnp.pad(lin_w_t, ((0, 0), (0, O_pad - O)))
        self.lin_wf = lin_w_t[:H].astype(jnp.bfloat16)
        self.lin_wb = lin_w_t[H:].astype(jnp.bfloat16)
        self.lin_b = jnp.pad(u((1, O), kl), ((0, 0), (0, O_pad - O)))
        self.o_pad = O_pad

    # ------------------------------------------------------------------
    def _plan(self, T, B):
        """Generation-aware time chunking + VMEM limit."""
        H = self.hidden_dim
        vmem_cap = _tpu_vmem_bytes()
        vmem_limit = int(vmem_cap * 3 // 4)

        # bytes streamed per timestep per buffer, worst kernel of the three
        per_t = max(
            20 * B * H,                                   # recurrence (bf16 gx + out)
            4 * B * self.input_dim + 16 * B * H,          # layer-0 gx (f32 in)
            12 * B * H + 4 * B * self.o_pad,              # concat + linear epilogue
        )
        w_bytes = max(16 * self.input_dim * H, 32 * H * H, 4 * H * self.o_pad)
        budget = max(vmem_cap // 16, vmem_cap // 4 - 2 * w_bytes)
        t_chunk = max(8, (budget // (2 * per_t)) // 8 * 8)   # 8-aligned
        t_chunk = min(t_chunk, _round_up(T, 8))
        t_pad = _round_up(T, t_chunk)

        # batch split across TensorCores (v7x) only when blocks stay 8-aligned
        ng = 2 if (B % 16 == 0) else 1
        return t_chunk, t_pad, ng, vmem_limit

    def __call__(self, x, hidden_h=None, hidden_c=None):
        """x: (T, B, input_dim). Returns (outputs, hidden_output, h_n, c_n)."""
        T, B, _ = x.shape
        H, L, O = self.hidden_dim, self.num_layers, self.output_dim
        G = 4 * H

        if hidden_h is None or hidden_c is None:
            hidden_h = jnp.zeros((2 * L, B, H), jnp.float32)
            hidden_c = jnp.zeros((2 * L, B, H), jnp.float32)
        hidden_h = hidden_h.astype(jnp.float32)
        hidden_c = hidden_c.astype(jnp.float32)

        t_chunk, T_pad, ng, vmem_limit = self._plan(T, B)
        nc = T_pad // t_chunk
        row_tile = t_chunk * B                      # multiple of 8 (t_chunk is)

        x_w = x if T_pad == T else jnp.pad(x, ((0, T_pad - T), (0, 0), (0, 0)))

        out_f = out_b = None
        h_fins, c_fins = [], []
        for layer, p in enumerate(self.layers):
            # (1) input projection for both directions as row-tiled matmuls
            if layer == 0:
                gx_f, gx_b = _run_gx_from_x(
                    x_w.reshape(T_pad * B, -1), p["wx_f"], p["wx_b"],
                    p["b_f"], p["b_b"],
                    row_tile=row_tile, vmem_limit=vmem_limit)
            else:
                gx_f, gx_b = _run_gx_from_pair(
                    out_f.reshape(T_pad * B, H), out_b.reshape(T_pad * B, H),
                    p["wx_f_top"], p["wx_f_bot"], p["wx_b_top"], p["wx_b_bot"],
                    p["b_f"], p["b_b"],
                    row_tile=row_tile, vmem_limit=vmem_limit)
            gx_f = gx_f.reshape(T_pad, B, G)
            gx_b = gx_b.reshape(T_pad, B, G)

            # (2) fused bidirectional recurrence, chunked over T (padded, masked)
            out_f, out_b, h_fin, c_fin = _run_bilstm(
                gx_f, gx_b, p["wh_cat"],
                hidden_h[2 * layer:2 * layer + 2],
                hidden_c[2 * layer:2 * layer + 2],
                t_chunk=t_chunk, t_real=T, ng=ng, vmem_limit=vmem_limit)
            h_fins.append(h_fin)
            c_fins.append(c_fin)

        h_n = jnp.concatenate(h_fins, axis=0)   # (2L, B, H), PyTorch ordering
        c_n = jnp.concatenate(c_fins, axis=0)

        # (3) fused concat + final linear (row-tiled; O padded to 128 lanes)
        hid2d, y2d = _run_concat_linear(
            out_f.reshape(T_pad * B, H), out_b.reshape(T_pad * B, H),
            self.lin_wf, self.lin_wb, self.lin_b,
            row_tile=row_tile, vmem_limit=vmem_limit)
        hidden_output = hid2d.reshape(T_pad, B, 2 * H)[:T]
        outputs = y2d.reshape(T_pad, B, self.o_pad)[:T, :, :O]

        return outputs, hidden_output, h_n, c_n


# ----------------------------------------------------------------------------
if __name__ == "__main__":
    key = jax.random.PRNGKey(0)
    k_param, k_input = jax.random.split(key)

    T, B = 8, 2
    input_dim, hidden_dim, output_dim, num_layers = 16, 32, 16, 2

    dec = Decoder(input_dim, output_dim, hidden_dim, num_layers,
                  dropout=0.0, bidirectional=True, batch_first=False,
                  key=k_param)

    x = jax.random.normal(k_input, (T, B, input_dim), jnp.float32)

    outputs, hidden_output, h_n, c_n = dec(x)
    jax.block_until_ready((outputs, hidden_output, h_n, c_n))

    assert outputs.shape == (T, B, output_dim)
    assert hidden_output.shape == (T, B, 2 * hidden_dim)
    assert h_n.shape == (num_layers * 2, B, hidden_dim)
    assert c_n.shape == (num_layers * 2, B, hidden_dim)
    assert bool(jnp.all(jnp.isfinite(outputs)))

    print("KERNEL_OK")
</pallas_src>

<mosaic_0001>
module attributes {stable_mosaic.version = 11 : i64} {
  func.func @_gx_from_x_kernel(%arg0: i32, %arg1: memref<16x16xf32, #tpu.memory_space<vmem>>, %arg2: memref<16x128xbf16, #tpu.memory_space<vmem>>, %arg3: memref<16x128xbf16, #tpu.memory_space<vmem>>, %arg4: memref<1x128xf32, #tpu.memory_space<vmem>>, %arg5: memref<1x128xf32, #tpu.memory_space<vmem>>, %arg6: memref<16x128xbf16, #tpu.memory_space<vmem>>, %arg7: memref<16x128xbf16, #tpu.memory_space<vmem>>) attributes {dimension_semantics = [#tpu.dimension_semantics<parallel>], iteration_bounds = array<i64: 1>, scalar_prefetch = 0 : i64, scratch_operands = 0 : i64, tpu.core_type = #tpu.core_type<tc>, window_params = [{transform_indices = @transform_0, window_bounds = array<i64: 16, 16>}, {pipeline_mode = #tpu.pipeline_mode<synchronous>, transform_indices = @transform_1, window_bounds = array<i64: 16, 128>}, {pipeline_mode = #tpu.pipeline_mode<synchronous>, transform_indices = @transform_2, window_bounds = array<i64: 16, 128>}, {pipeline_mode = #tpu.pipeline_mode<synchronous>, transform_indices = @transform_3, window_bounds = array<i64: 1, 128>}, {pipeline_mode = #tpu.pipeline_mode<synchronous>, transform_indices = @transform_4, window_bounds = array<i64: 1, 128>}, {transform_indices = @transform_5, window_bounds = array<i64: 16, 128>}, {transform_indices = @transform_6, window_bounds = array<i64: 16, 128>}]} {
    %c0 = arith.constant 0 : index
    %c0_0 = arith.constant 0 : index
    %0 = vector.load %arg1[%c0, %c0_0] : memref<16x16xf32, #tpu.memory_space<vmem>>, vector<16x16xf32>
    %1 = arith.truncf %0 : vector<16x16xf32> to vector<16x16xbf16>
    %c0_1 = arith.constant 0 : index
    %c0_2 = arith.constant 0 : index
    %2 = vector.load %arg2[%c0_1, %c0_2] : memref<16x128xbf16, #tpu.memory_space<vmem>>, vector<16x128xbf16>
    %cst = arith.constant dense<0.000000e+00> : vector<16x128xf32>
    %3 = tpu.matmul %1, %2, %cst {dimension_numbers = #tpu.dot_dimension_numbers<[1], [0], [0], [1], [0, 0, 1, 1], [], []>} : vector<16x16xbf16>, vector<16x128xbf16>, vector<16x128xf32> -> vector<16x128xf32>
    %c0_3 = arith.constant 0 : index
    %c0_4 = arith.constant 0 : index
    %4 = vector.load %arg4[%c0_3, %c0_4] : memref<1x128xf32, #tpu.memory_space<vmem>>, vector<1x128xf32>
    %5 = vector.broadcast %4 : vector<1x128xf32> to vector<16x128xf32>
    %6 = arith.addf %3, %5 : vector<16x128xf32>
    %c0_5 = arith.constant 0 : index
    %c0_6 = arith.constant 0 : index
    %7 = vector.load %arg3[%c0_5, %c0_6] : memref<16x128xbf16, #tpu.memory_space<vmem>>, vector<16x128xbf16>
    %cst_7 = arith.constant dense<0.000000e+00> : vector<16x128xf32>
    %8 = tpu.matmul %1, %7, %cst_7 {dimension_numbers = #tpu.dot_dimension_numbers<[1], [0], [0], [1], [0, 0, 1, 1], [], []>} : vector<16x16xbf16>, vector<16x128xbf16>, vector<16x128xf32> -> vector<16x128xf32>
    %c0_8 = arith.constant 0 : index
    %c0_9 = arith.constant 0 : index
    %9 = vector.load %arg5[%c0_8, %c0_9] : memref<1x128xf32, #tpu.memory_space<vmem>>, vector<1x128xf32>
    %10 = vector.broadcast %9 : vector<1x128xf32> to vector<16x128xf32>
    %11 = arith.addf %8, %10 : vector<16x128xf32>
    %12 = arith.truncf %6 : vector<16x128xf32> to vector<16x128xbf16>
    %c0_10 = arith.constant 0 : index
    %c0_11 = arith.constant 0 : index
    %13 = vector.load %arg6[%c0_10, %c0_11] : memref<16x128xbf16, #tpu.memory_space<vmem>>, vector<16x128xbf16>
    tpu.vector_store %arg6[%c0_10, %c0_11], %12 {strides = array<i32>} : memref<16x128xbf16, #tpu.memory_space<vmem>>, vector<16x128xbf16>,
    %14 = arith.truncf %11 : vector<16x128xf32> to vector<16x128xbf16>
    %c0_12 = arith.constant 0 : index
    %c0_13 = arith.constant 0 : index
    %15 = vector.load %arg7[%c0_12, %c0_13] : memref<16x128xbf16, #tpu.memory_space<vmem>>, vector<16x128xbf16>
    tpu.vector_store %arg7[%c0_12, %c0_13], %14 {strides = array<i32>} : memref<16x128xbf16, #tpu.memory_space<vmem>>, vector<16x128xbf16>,
    return
  }
  func.func @transform_0(%arg0: i32) -> (i32, i32) {
    %c0_i32 = arith.constant 0 : i32
    %c0_i32_0 = arith.constant 0 : i32
    return %arg0, %c0_i32 : i32, i32
  }
  func.func @transform_1(%arg0: i32) -> (i32, i32) {
    %c0_i32 = arith.constant 0 : i32
    %c0_i32_0 = arith.constant 0 : i32
    %c0_i32_1 = arith.constant 0 : i32
    return %c0_i32, %c0_i32_0 : i32, i32
  }
  func.func @transform_2(%arg0: i32) -> (i32, i32) {
    %c0_i32 = arith.constant 0 : i32
    %c0_i32_0 = arith.constant 0 : i32
    %c0_i32_1 = arith.constant 0 : i32
    return %c0_i32, %c0_i32_0 : i32, i32
  }
  func.func @transform_3(%arg0: i32) -> (i32, i32) {
    %c0_i32 = arith.constant 0 : i32
    %c0_i32_0 = arith.constant 0 : i32
    %c0_i32_1 = arith.constant 0 : i32
    return %c0_i32, %c0_i32_0 : i32, i32
  }
  func.func @transform_4(%arg0: i32) -> (i32, i32) {
    %c0_i32 = arith.constant 0 : i32
    %c0_i32_0 = arith.constant 0 : i32
    %c0_i32_1 = arith.constant 0 : i32
    return %c0_i32, %c0_i32_0 : i32, i32
  }
  func.func @transform_5(%arg0: i32) -> (i32, i32) {
    %c0_i32 = arith.constant 0 : i32
    %c0_i32_0 = arith.constant 0 : i32
    return %arg0, %c0_i32 : i32, i32
  }
  func.func @transform_6(%arg0: i32) -> (i32, i32) {
    %c0_i32 = arith.constant 0 : i32
    %c0_i32_0 = arith.constant 0 : i32
    return %arg0, %c0_i32 : i32, i32
  }
}

</mosaic_0001>

<llo_original>
// kernel: tpu_custom_call.1
$region0: #{tpu_custom_call.1}
  #allocation0 [shape = 'u32[]', space=smem, size = 0x4, offset = 0x4, fixed_abs, tag = 'smem constant byte address 0x4 - core index']
  #allocation1 [shape = 'u32[144,128]{1,0:T(1,128)}', space=vmem, size = 0x12000, scoped, tag = 'internal scratch']
  %s0 = inlined_call_operand.hbm [shape: f32[16,16], index: 0, kind: input, shape index: {}]
  %s1 = inlined_call_operand.hbm [shape: bf16[16,128], index: 1, kind: input, shape index: {}]
  %s2 = inlined_call_operand.hbm [shape: bf16[16,128], index: 2, kind: input, shape index: {}]
  %s3 = inlined_call_operand.vmem [shape: f32[1,128], index: 3, kind: input, shape index: {}]
  %s4 = inlined_call_operand.vmem [shape: f32[1,128], index: 4, kind: input, shape index: {}]
  %s5 = inlined_call_operand.hbm [shape: bf16[16,128], index: 5, kind: output, shape index: {0}]
  %s6 = inlined_call_operand.hbm [shape: bf16[16,128], index: 6, kind: output, shape index: {1}]
  %7 = xla_tuple %s5, %s6
  %s8 = sld [smem:[#allocation0]]
  $region50: #{tpu_custom_call.1} parent=0
    _
  %s10 = ssub.s32 1, %s8
  %s11 = scalar_select 0, %s10, %s8
  $region1: #{tpu_custom_call.1} parent=0
    #allocation2 [shape = 'u8[8192]{0}', space=vmem, size = 0x2000, scoped, tag = 'input window, operand 0, single buffered']
    #allocation3 [shape = 's32[1]{0}', space=sflag, size = 0x4, scoped, tag = 'scoped memory for tpu_custom_call.1']
    #allocation4 [shape = 's32[1]{0}', space=sflag, size = 0x4, scoped, tag = 'scoped memory for tpu_custom_call.1']
    #allocation5 [shape = 'u8[4096]{0}', space=vmem, size = 0x1000, scoped, tag = 'input window, operand 1, single buffered']
    #allocation6 [shape = 's32[1]{0}', space=sflag, size = 0x4, scoped, tag = 'scoped memory for tpu_custom_call.1']
    #allocation7 [shape = 'u8[4096]{0}', space=vmem, size = 0x1000, scoped, tag = 'input window, operand 2, single buffered']
    #allocation8 [shape = 'u8[4096]{0}', space=vmem, size = 0x1000, scoped, tag = 'output window, operand 0, single buffered']
    #allocation9 [shape = 'u8[4096]{0}', space=vmem, size = 0x1000, scoped, tag = 'output window, operand 1, single buffered']
    #allocation10 [shape = 's32[1]{0}', space=sflag, size = 0x4, scoped, tag = 'scoped memory for tpu_custom_call.1']
    %12 = vsyncpa [#allocation3], 0
    %13 = vsyncpa [#allocation6], 0
    %14 = vsyncpa [#allocation4], 0
    %15 = vsyncpa [#allocation10], 0
    // Predicated region
    $region2: #{tpu_custom_call.1} parent=1 // pred_check
      _
    $region3: #{tpu_custom_call.1} parent=1 // pred_check_branch
      %17 = sbr.rel (0) target = $region5
    $region4: #{tpu_custom_call.1} parent=1 // pred_region
      %s19 = ssub.s32 256, 256
      %20 = vsyncadd [#allocation3], %s19
      %s21 = sshll.u32 [#allocation2], 4
      %s22 = int_to_ptr.vmem [resolvable:$true] %s21
      %27 = dma.hbm_to_vmem [thread:$0]  %s0, 256, %s22, [#allocation3], 128, 128, 8
    $region5: #{tpu_custom_call.1} parent=1 // pred_fallthru
      _
    // Predicated region
    $region6: #{tpu_custom_call.1} parent=1 // pred_check
      _
    $region7: #{tpu_custom_call.1} parent=1 // pred_check_branch
      %29 = sbr.rel (0) target = $region9
    $region8: #{tpu_custom_call.1} parent=1 // pred_region
      %s31 = ssub.s32 128, 128
      %32 = vsyncadd [#allocation6], %s31
      %s33 = sshll.u32 [#allocation5], 4
      %s34 = int_to_ptr.vmem [resolvable:$true] %s33
      %39 = dma.hbm_to_vmem [thread:$0]  %s1, 128, %s34, [#allocation6], 64, 64, 4
    $region9: #{tpu_custom_call.1} parent=1 // pred_fallthru
      _
    // Predicated region
    $region10: #{tpu_custom_call.1} parent=1 // pred_check
      _
    $region11: #{tpu_custom_call.1} parent=1 // pred_check_branch
      %41 = sbr.rel (0) target = $region13
    $region12: #{tpu_custom_call.1} parent=1 // pred_region
      %s43 = ssub.s32 128, 128
      %44 = vsyncadd [#allocation6], %s43
      %s45 = sshll.u32 [#allocation7], 4
      %s46 = int_to_ptr.vmem [resolvable:$true] %s45
      %51 = dma.hbm_to_vmem [thread:$0]  %s2, 128, %s46, [#allocation6], 64, 64, 4
    $region13: #{tpu_custom_call.1} parent=1 // pred_fallthru
      _
    // Predicated region
    $region14: #{tpu_custom_call.1} parent=1 // pred_check
      _
    $region15: #{tpu_custom_call.1} parent=1 // pred_check_branch
      %53 = sbr.rel (0) target = $region17
    $region16: #{tpu_custom_call.1} parent=1 // pred_region
      _
    $region17: #{tpu_custom_call.1} parent=1 // pred_fallthru
      _
    // Predicated region
    $region18: #{tpu_custom_call.1} parent=1 // pred_check
      _
    $region19: #{tpu_custom_call.1} parent=1 // pred_check_branch
      %55 = sbr.rel (0) target = $region21
    $region20: #{tpu_custom_call.1} parent=1 // pred_region
      _
    $region21: #{tpu_custom_call.1} parent=1 // pred_fallthru
      _
    // Predicated region
    $region22: #{tpu_custom_call.1} parent=1 // pred_check
      _
    $region23: #{tpu_custom_call.1} parent=1 // pred_check_branch
      %57 = sbr.rel (0) target = $region25
    $region24: #{tpu_custom_call.1} parent=1 // pred_region
      %58 = dma.done [#allocation3], 256
    $region25: #{tpu_custom_call.1} parent=1 // pred_fallthru
      _
    // Predicated region
    $region26: #{tpu_custom_call.1} parent=1 // pred_check
      _
    $region27: #{tpu_custom_call.1} parent=1 // pred_check_branch
      %60 = sbr.rel (0) target = $region29
    $region28: #{tpu_custom_call.1} parent=1 // pred_region
      %61 = dma.done [#allocation6], 128
    $region29: #{tpu_custom_call.1} parent=1 // pred_fallthru
      _
    // Predicated region
    $region30: #{tpu_custom_call.1} parent=1 // pred_check
      _
    $region31: #{tpu_custom_call.1} parent=1 // pred_check_branch
      %63 = sbr.rel (0) target = $region33
    $region32: #{tpu_custom_call.1} parent=1 // pred_region
      %64 = dma.done [#allocation6], 128
    $region33: #{tpu_custom_call.1} parent=1 // pred_fallthru
      _
    %v66 = vld [vmem:[#allocation2] sm:$0xff]
    %v67 = vld [vmem:[#allocation2 + $0x8] sm:$0xff]
    %v68 = vpack.c.bf16 %v67, %v66
    %v69 = vld [vmem:[#allocation5] sm:$0xf]
    %v70 = vld [vmem:[#allocation5 + $0x4] sm:$0xf]
    %v71 = vld [vmem:[%s3] sm:$0x1]
    %v73 = vlaneseq
    %v74 = vshrl.u32 %v73, 7
    %v75 = vsub.s32 0, %v74
    %v76 = vrot.slane %v71, %v75
    %v80 = vunpack.c.l.b16 %v69
    %v81 = vunpack.c.l.b16 %v70
    %v82 = vpack.c.b16 %v81, %v80
    %vm84 = vcmask 130048
    %v86 = vsel %vm84, %v68, 0
    %88 = vmatprep.subr.bf16.mxu0 0
    %89 = vmatpush1.bf16.msra.mxu0 0
    %90 = vmatprep.subr.bf16.mxu0 0
    %91 = vmatpush1.bf16.msra.mxu0 0
    %92 = vmatprep.subr.bf16.mxu0 0
    %93 = vmatpush1.bf16.msra.mxu0 0
    %94 = vmatprep.subr.bf16.mxu0 0
    %95 = vmatpush1.bf16.msra.mxu0 0
    %96 = vmatprep.subr.bf16.mxu0 0
    %97 = vmatpush1.bf16.msra.mxu0 0
    %98 = vmatprep.subr.bf16.mxu0 0
    %99 = vmatpush1.bf16.msra.mxu0 0
    %100 = vmatprep.subr.bf16.mxu0 0
    %101 = vmatpush1.bf16.msra.mxu0 0
    %102 = vmatprep.subr.bf16.mxu0 0
    %103 = vmatpush1.bf16.msra.mxu0 %v82
    %104 = vmatprep.subr.bf16.mxu0 0
    %105 = vmatpush2.bf16.msra.mxu0 0
    %106 = vmatprep.subr.bf16.mxu0 0
    %107 = vmatpush2.bf16.msra.mxu0 0
    %108 = vmatprep.subr.bf16.mxu0 0
    %109 = vmatpush2.bf16.msra.mxu0 0
    %110 = vmatprep.subr.bf16.mxu0 0
    %111 = vmatpush2.bf16.msra.mxu0 0
    %112 = vmatprep.subr.bf16.mxu0 0
    %113 = vmatpush2.bf16.msra.mxu0 0
    %114 = vmatprep.subr.bf16.mxu0 0
    %115 = vmatpush2.bf16.msra.mxu0 0
    %116 = vmatprep.subr.bf16.mxu0 0
    %117 = vmatpush2.bf16.msra.mxu0 0
    %118 = vmatprep.subr.bf16.mxu0 0
    %119 = vmatpush2.bf16.msra.mxu0 0
    %120 = vmatprep.mubr.bf16.mxu0 0
    %121 = vmatmul.mubr.bf16.gmra.mxu0 %v86
    %v122 = vpop.f32.mrf.mxu0
    %v123 = vadd.f32 %v76, %v122
    %v124 = vpop.f32.mrf.mxu0
    %v125 = vpop.f32.mrf.mxu0
    %v126 = vadd.f32 %v76, %v125
    %v127 = vpop.f32.mrf.mxu0
    %128 = vdwg.mxu0
    %v129 = vld [vmem:[#allocation7] sm:$0xf]
    %v130 = vld [vmem:[#allocation7 + $0x4] sm:$0xf]
    %v131 = vld [vmem:[%s4] sm:$0x1]
    %v133 = vlaneseq
    %v134 = vshrl.u32 %v133, 7
    %v135 = vsub.s32 0, %v134
    %v136 = vrot.slane %v131, %v135
    %v140 = vunpack.c.l.b16 %v129
    %v141 = vunpack.c.l.b16 %v130
    %v142 = vpack.c.b16 %v141, %v140
    %144 = vmatprep.subr.bf16.mxu0 0
    %145 = vmatpush1.bf16.msra.mxu0 0
    %146 = vmatprep.subr.bf16.mxu0 0
    %147 = vmatpush1.bf16.msra.mxu0 0
    %148 = vmatprep.subr.bf16.mxu0 0
    %149 = vmatpush1.bf16.msra.mxu0 0
    %150 = vmatprep.subr.bf16.mxu0 0
    %151 = vmatpush1.bf16.msra.mxu0 0
    %152 = vmatprep.subr.bf16.mxu0 0
    %153 = vmatpush1.bf16.msra.mxu0 0
    %154 = vmatprep.subr.bf16.mxu0 0
    %155 = vmatpush1.bf16.msra.mxu0 0
    %156 = vmatprep.subr.bf16.mxu0 0
    %157 = vmatpush1.bf16.msra.mxu0 0
    %158 = vmatprep.subr.bf16.mxu0 0
    %159 = vmatpush1.bf16.msra.mxu0 %v142
    %160 = vmatprep.subr.bf16.mxu0 0
    %161 = vmatpush2.bf16.msra.mxu0 0
    %162 = vmatprep.subr.bf16.mxu0 0
    %163 = vmatpush2.bf16.msra.mxu0 0
    %164 = vmatprep.subr.bf16.mxu0 0
    %165 = vmatpush2.bf16.msra.mxu0 0
    %166 = vmatprep.subr.bf16.mxu0 0
    %167 = vmatpush2.bf16.msra.mxu0 0
    %168 = vmatprep.subr.bf16.mxu0 0
    %169 = vmatpush2.bf16.msra.mxu0 0
    %170 = vmatprep.subr.bf16.mxu0 0
    %171 = vmatpush2.bf16.msra.mxu0 0
    %172 = vmatprep.subr.bf16.mxu0 0
    %173 = vmatpush2.bf16.msra.mxu0 0
    %174 = vmatprep.subr.bf16.mxu0 0
    %175 = vmatpush2.bf16.msra.mxu0 0
    %176 = vmatprep.mubr.bf16.mxu0 0
    %177 = vmatmul.mubr.bf16.gmra.mxu0 %v86
    %v178 = vpop.f32.mrf.mxu0
    %v179 = vadd.f32 %v136, %v178
    %v180 = vpop.f32.mrf.mxu0
    %v181 = vpop.f32.mrf.mxu0
    %v182 = vadd.f32 %v136, %v181
    %v183 = vpop.f32.mrf.mxu0
    %184 = vdwg.mxu0
    %v185 = vpack.c.bf16 %v126, %v123
    %v187 = vunpack.c.l.b16 %v185
    %v188 = vunpack.c.h.b16 %v185
    %v189 = vpack.c.b16 %v187, %v187
    %v190 = vpack.c.b16 %v188, %v188
    %193 = vst [vmem:[#allocation8] sm:$0xf] %v189
    %194 = vst [vmem:[#allocation8 + $0x4] sm:$0xf] %v190
    %v195 = vpack.c.bf16 %v182, %v179
    %v197 = vunpack.c.l.b16 %v195
    %v198 = vunpack.c.h.b16 %v195
    %v199 = vpack.c.b16 %v197, %v197
    %v200 = vpack.c.b16 %v198, %v198
    %203 = vst [vmem:[#allocation9] sm:$0xf] %v199
    %204 = vst [vmem:[#allocation9 + $0x4] sm:$0xf] %v200
    // Predicated region
    $region34: #{tpu_custom_call.1} parent=1 // pred_check
      _
    $region35: #{tpu_custom_call.1} parent=1 // pred_check_branch
      %206 = sbr.rel (0) target = $region37
    $region36: #{tpu_custom_call.1} parent=1 // pred_region
      %s208 = ssub.s32 128, 128
      %209 = vsyncadd [#allocation4], %s208
      %s210 = sshll.u32 [#allocation8], 4
      %s211 = int_to_ptr.vmem [resolvable:$true] %s210
      %216 = dma.vmem_to_hbm [thread:$0]  %s211, 128, %s5, [#allocation4], 64, 64, 4
    $region37: #{tpu_custom_call.1} parent=1 // pred_fallthru
      _
    // Predicated region
    $region38: #{tpu_custom_call.1} parent=1 // pred_check
      _
    $region39: #{tpu_custom_call.1} parent=1 // pred_check_branch
      %218 = sbr.rel (0) target = $region41
    $region40: #{tpu_custom_call.1} parent=1 // pred_region
      %s220 = ssub.s32 128, 128
      %221 = vsyncadd [#allocation10], %s220
      %s222 = sshll.u32 [#allocation9], 4
      %s223 = int_to_ptr.vmem [resolvable:$true] %s222
      %228 = dma.vmem_to_hbm [thread:$0]  %s223, 128, %s6, [#allocation10], 64, 64, 4
    $region41: #{tpu_custom_call.1} parent=1 // pred_fallthru
      _
    // Predicated region
    $region42: #{tpu_custom_call.1} parent=1 // pred_check
      _
    $region43: #{tpu_custom_call.1} parent=1 // pred_check_branch
      %230 = sbr.rel (0) target = $region45
    $region44: #{tpu_custom_call.1} parent=1 // pred_region
      %231 = dma.done [#allocation4], 128
    $region45: #{tpu_custom_call.1} parent=1 // pred_fallthru
      _
    // Predicated region
    $region46: #{tpu_custom_call.1} parent=1 // pred_check
      _
    $region47: #{tpu_custom_call.1} parent=1 // pred_check_branch
      %233 = sbr.rel (0) target = $region49
    $region48: #{tpu_custom_call.1} parent=1 // pred_region
      %234 = dma.done [#allocation10], 128
    $region49: #{tpu_custom_call.1} parent=1 // pred_fallthru
      _
    %235 = vsyncpa [#allocation3], 1
    %236 = vsyncpa [#allocation6], 1
    %237 = vsyncpa [#allocation4], 1
    %238 = vsyncpa [#allocation10], 1

</llo_original>
